<compile_context>
chip_gen: v7x
topology: tpu7x:2x2x1
jax: 0.10.0
libtpu: 0.0.40
codegen_flags: <defaults>
</compile_context>

<pallas_src>
import functools

import jax
import jax.numpy as jnp
from jax.experimental import pallas as pl
from jax.experimental.pallas import tpu as pltpu


def _cdiv(a, b):
    return -(-a // b)


def _round_up(x, m):
    return ((x + m - 1) // m) * m


def _round_down(x, m):
    return (x // m) * m


def _vmem_config():
    """Per-generation (tile budget, scoped VMEM limit) in bytes."""
    cap = 64 * 1024 * 1024  # conservative default == v7x per-core VMEM
    try:
        cap = int(pltpu.get_tpu_info().vmem_capacity_bytes)
    except Exception:
        pass
    budget = (cap * 3) // 8                       # 48 MiB (v5e/v6e) / 24 MiB (v7x)
    limit = min((cap * 3) // 4, 96 * 1024 * 1024)  # 96 MiB (v5e/v6e) / 48 MiB (v7x)
    return budget, limit


# ---------------------------------------------------------------------------
# Kernels
# ---------------------------------------------------------------------------
def _proj_kernel(x_ref, w_ref, o_ref):
    # Full-K block: one MXU matmul per grid step, f32 accumulation on the MXU.
    o_ref[...] = jnp.dot(
        x_ref[...], w_ref[...], preferred_element_type=jnp.float32
    ).astype(o_ref.dtype)


def _proj_kernel_acc_inplace(x_ref, w_ref, o_ref):
    # K tiled (innermost, "arbitrary"); o_ref is f32 and stays resident across
    # the K axis, so accumulate straight into it (no VMEM scratch).
    @pl.when(pl.program_id(2) == 0)
    def _():
        o_ref[...] = jnp.zeros_like(o_ref)

    o_ref[...] += jnp.dot(
        x_ref[...], w_ref[...], preferred_element_type=jnp.float32
    )


def _proj_kernel_acc_scratch(x_ref, w_ref, o_ref, acc_ref):
    # K tiled, non-f32 output: accumulate in an f32 scratch, cast at the end.
    k = pl.program_id(2)

    @pl.when(k == 0)
    def _():
        acc_ref[...] = jnp.zeros_like(acc_ref)

    acc_ref[...] += jnp.dot(
        x_ref[...], w_ref[...], preferred_element_type=jnp.float32
    )

    @pl.when(k == pl.num_programs(2) - 1)
    def _():
        o_ref[...] = acc_ref[...].astype(o_ref.dtype)


# ---------------------------------------------------------------------------
# Wrapper
# ---------------------------------------------------------------------------
@functools.partial(jax.jit, static_argnames=("compute_dtype", "force_pallas"))
def projection_matrix_forward(x, proj_matrix, *, compute_dtype=None,
                              force_pallas=False):
    """PyTorch ProjectionMatrix.forward equivalent: returns x @ proj_matrix.

    compute_dtype: cast x / proj_matrix before the matmul. jnp.bfloat16 is
    strongly recommended for throughput (MXU-native path, half the HBM bytes
    on the streaming x read); accumulation is always f32 and the output keeps
    x's dtype.  Default None keeps the module's f32 numerics (same default
    matmul precision as XLA's `x @ w` on TPU).
    """
    teacher_dim, student_dim = proj_matrix.shape
    orig_shape = x.shape
    assert orig_shape[-1] == teacher_dim

    out_dtype = x.dtype
    x2d = x.reshape(-1, teacher_dim)
    w = proj_matrix
    if compute_dtype is not None:
        x2d = x2d.astype(compute_dtype)
        w = w.astype(compute_dtype)

    M, K, N = x2d.shape[0], teacher_dim, student_dim

    # Tiny problems: pallas_call fixed overhead dominates; let XLA handle it.
    if not force_pallas and (M * K * N < (1 << 20) or M < 8):
        out2d = jnp.dot(
            x2d, w, preferred_element_type=jnp.float32
        ).astype(out_dtype)
        return out2d.reshape(*orig_shape[:-1], student_dim)

    xbytes = x2d.dtype.itemsize
    wbytes = w.dtype.itemsize
    obytes = jnp.dtype(out_dtype).itemsize

    budget, vmem_limit = _vmem_config()

    # Sublane alignment for the row (M) tile: 8 rows for 32-bit compute, 16
    # for bf16, 32 for fp8 (sub-32-bit dtypes pack along sublanes).
    sublane = max(8, 32 // xbytes, 32 // obytes)

    scratch = []
    w_slab = K * N * wbytes                            # full projection matrix
    per_row_full = 2 * K * xbytes + 2 * N * obytes     # x + out per row (dbl-buffered)

    if 2 * w_slab + sublane * per_row_full <= budget:
        # ------------------------------------------------------------------
        # Fast path: W fully resident in VMEM, stream x in large row tiles.
        # ------------------------------------------------------------------
        tm = _round_down((budget - 2 * w_slab) // per_row_full, sublane)
        tm = max(sublane, min(tm, 2048))
        if tm >= M:
            if M >= 2 * sublane:
                # >=2 blocks on the "parallel" axis keeps both v7x TCs busy.
                tm = _round_up(_cdiv(M, 2), sublane)
            else:
                tm = M
        grid = (_cdiv(M, tm),)
        x_spec = pl.BlockSpec((tm, K), lambda i: (i, 0))
        # NOTE: W's block index never changes; pl.Buffered(1) on this spec
        # would drop its second VMEM buffer.  Kept default-buffered here for
        # lowering robustness; the budget already accounts for two buffers.
        w_spec = pl.BlockSpec((K, N), lambda i: (0, 0))
        o_spec = pl.BlockSpec((tm, N), lambda i: (i, 0))
        dim_sem = ("parallel",)
        kernel = _proj_kernel
    else:
        # Can W be column-tiled while keeping the full K per block?
        tn_cap = _round_down((budget // 2) // max(1, 2 * K * wbytes), 128)
        rows_ok = (
            sublane * (2 * K * xbytes + 2 * 128 * obytes)
            + 2 * K * 128 * wbytes
            <= budget
        )
        if tn_cap >= 128 and rows_ok:
            # --------------------------------------------------------------
            # Column-tiled W, full K per block (no reduction grid axis).
            # --------------------------------------------------------------
            tn = min(tn_cap, _round_up(N, 128))
            if tn >= 256:
                tn = _round_down(tn, 256)   # 256x256-MXU friendly on v6e/v7x
            grid_n = _cdiv(N, tn)
            per_row = 2 * K * xbytes + 2 * tn * obytes
            tm = _round_down((budget - 2 * K * tn * wbytes) // per_row, sublane)
            tm = max(sublane, min(tm, 2048))
            if tm >= M:
                if grid_n == 1 and M >= 2 * sublane:
                    tm = _round_up(_cdiv(M, 2), sublane)
                else:
                    tm = M
            grid_m = _cdiv(M, tm)
            # Grid order: the inner axis re-streams one operand — pick the
            # order whose re-streamed bytes are smaller.
            restream_w = grid_m * K * N * wbytes   # j inner -> W refetched per i
            restream_x = grid_n * M * K * xbytes   # i inner -> x refetched per j
            if restream_w <= restream_x:
                grid = (grid_m, grid_n)
                x_spec = pl.BlockSpec((tm, K), lambda i, j: (i, 0))
                w_spec = pl.BlockSpec((K, tn), lambda i, j: (0, j))
                o_spec = pl.BlockSpec((tm, tn), lambda i, j: (i, j))
            else:
                grid = (grid_n, grid_m)
                x_spec = pl.BlockSpec((tm, K), lambda j, i: (i, 0))
                w_spec = pl.BlockSpec((K, tn), lambda j, i: (0, j))
                o_spec = pl.BlockSpec((tm, tn), lambda j, i: (i, j))
            dim_sem = ("parallel", "parallel")
            kernel = _proj_kernel
        else:
            # --------------------------------------------------------------
            # teacher_dim too large for a full-K tile: accumulate over K.
            # --------------------------------------------------------------
            tk = 512
            for cand in (2048, 1024, 512, 256, 128):
                if K % cand == 0 and 2 * cand * 128 * wbytes <= budget // 2:
                    tk = cand
                    break
            k_pad = _round_up(K, tk)
            if k_pad != K:   # rare; zero K-padding is exact for matmul
                x2d = jnp.pad(x2d, ((0, 0), (0, k_pad - K)))
                w = jnp.pad(w, ((0, k_pad - K), (0, 0)))
            grid_k = k_pad // tk
            tn_cap = _round_down((budget // 3) // max(1, 2 * tk * wbytes), 128)
            tn = max(128, min(tn_cap, _round_up(N, 128), 1024))
            grid_n = _cdiv(N, tn)
            in_place = jnp.dtype(out_dtype) == jnp.dtype(jnp.float32)
            acc_row = 0 if in_place else tn * 4
            per_row = 2 * tk * xbytes + 2 * tn * obytes + acc_row
            tm = _round_down((budget - 2 * tk * tn * wbytes) // per_row, sublane)
            tm = max(sublane, min(tm, 1024))
            if tm >= M:
                tm = M
            grid_m = _cdiv(M, tm)
            grid = (grid_m, grid_n, grid_k)
            x_spec = pl.BlockSpec((tm, tk), lambda i, j, k: (i, k))
            w_spec = pl.BlockSpec((tk, tn), lambda i, j, k: (k, j))
            o_spec = pl.BlockSpec((tm, tn), lambda i, j, k: (i, j))
            dim_sem = ("parallel", "parallel", "arbitrary")
            if in_place:
                kernel = _proj_kernel_acc_inplace
            else:
                kernel = _proj_kernel_acc_scratch
                scratch = [pltpu.VMEM((tm, tn), jnp.float32)]

    cost = pl.CostEstimate(
        flops=2 * M * K * N,
        transcendentals=0,
        bytes_accessed=M * K * xbytes + K * N * wbytes + M * N * obytes,
    )

    out2d = pl.pallas_call(
        kernel,
        out_shape=jax.ShapeDtypeStruct((M, N), out_dtype),
        grid_spec=pltpu.PrefetchScalarGridSpec(
            num_scalar_prefetch=0,
            grid=grid,
            in_specs=[x_spec, w_spec],
            out_specs=o_spec,
            scratch_shapes=scratch,
        ),
        compiler_params=pltpu.CompilerParams(
            dimension_semantics=dim_sem,
            vmem_limit_bytes=vmem_limit,
        ),
        cost_estimate=cost,
    )(x2d, w)

    return out2d.reshape(*orig_shape[:-1], student_dim)


if __name__ == "__main__":
    key = jax.random.PRNGKey(0)
    k1, k2, k3, k4 = jax.random.split(key, 4)

    # 1) Small shapes from the module spec: batch=2, seq=8, teacher=32 -> student=64.
    batch, seq, teacher_dim, student_dim = 2, 8, 32, 64
    x = jax.random.normal(k1, (batch, seq, teacher_dim), dtype=jnp.float32)
    # Deterministic init mirroring nn.Parameter(torch.randn(T, S) * 0.01).
    proj = jax.random.normal(k2, (teacher_dim, student_dim), dtype=jnp.float32) * 0.01

    out = jax.block_until_ready(
        projection_matrix_forward(x, proj, force_pallas=True))
    ref = x @ proj
    assert out.shape == (batch, seq, student_dim)
    assert jnp.allclose(out, ref, atol=5e-3, rtol=5e-2), "small f32 mismatch"

    # 2) Medium shapes: exercises the resident-W streaming path (2 row blocks).
    x2 = jax.random.normal(k3, (4, 128, 256), dtype=jnp.float32)
    proj2 = jax.random.normal(k4, (256, 128), dtype=jnp.float32) * 0.01
    ref2 = x2 @ proj2
    out2 = jax.block_until_ready(projection_matrix_forward(x2, proj2))
    assert jnp.allclose(out2, ref2, atol=5e-3, rtol=5e-2), "medium f32 mismatch"

    # 3) bf16 compute path (MXU-native); looser tolerance vs the f32 reference.
    out3 = jax.block_until_ready(
        projection_matrix_forward(x2, proj2, compute_dtype=jnp.bfloat16))
    assert jnp.allclose(out3, ref2, atol=2e-2, rtol=1e-1), "bf16 mismatch"

    # 4) Ragged row count (M = 3*7 = 21): partial edge block on the M axis,
    #    handled by masked stores — no padding copies of x.
    x4 = jax.random.normal(k1, (3, 7, teacher_dim), dtype=jnp.float32)
    out4 = jax.block_until_ready(
        projection_matrix_forward(x4, proj, force_pallas=True))
    assert out4.shape == (3, 7, student_dim)
    assert jnp.allclose(out4, x4 @ proj, atol=5e-3, rtol=5e-2), "ragged mismatch"

    print("KERNEL_OK")
</pallas_src>

<mosaic_0001>
module attributes {stable_mosaic.version = 11 : i64} {
  func.func @_proj_kernel(%arg0: i32, %arg1: memref<8x32xf32, #tpu.memory_space<vmem>>, %arg2: memref<32x64xf32, #tpu.memory_space<vmem>>, %arg3: memref<8x64xf32, #tpu.memory_space<vmem>>) attributes {dimension_semantics = [#tpu.dimension_semantics<parallel>], iteration_bounds = array<i64: 2>, scalar_prefetch = 0 : i64, scratch_operands = 0 : i64, tpu.core_type = #tpu.core_type<tc>, window_params = [{transform_indices = @transform_0, window_bounds = array<i64: 8, 32>}, {pipeline_mode = #tpu.pipeline_mode<synchronous>, transform_indices = @transform_1, window_bounds = array<i64: 32, 64>}, {transform_indices = @transform_2, window_bounds = array<i64: 8, 64>}]} {
    %c0 = arith.constant 0 : index
    %c0_0 = arith.constant 0 : index
    %0 = vector.load %arg1[%c0, %c0_0] : memref<8x32xf32, #tpu.memory_space<vmem>>, vector<8x32xf32>
    %c0_1 = arith.constant 0 : index
    %c0_2 = arith.constant 0 : index
    %1 = vector.load %arg2[%c0_1, %c0_2] : memref<32x64xf32, #tpu.memory_space<vmem>>, vector<32x64xf32>
    %cst = arith.constant dense<0.000000e+00> : vector<8x64xf32>
    %2 = tpu.matmul %0, %1, %cst {dimension_numbers = #tpu.dot_dimension_numbers<[1], [0], [0], [1], [0, 0, 1, 1], [], []>} : vector<8x32xf32>, vector<32x64xf32>, vector<8x64xf32> -> vector<8x64xf32>
    %c0_3 = arith.constant 0 : index
    %c0_4 = arith.constant 0 : index
    %3 = vector.load %arg3[%c0_3, %c0_4] : memref<8x64xf32, #tpu.memory_space<vmem>>, vector<8x64xf32>
    tpu.vector_store %arg3[%c0_3, %c0_4], %2 {strides = array<i32>} : memref<8x64xf32, #tpu.memory_space<vmem>>, vector<8x64xf32>,
    return
  }
  func.func @transform_0(%arg0: i32) -> (i32, i32) {
    %c0_i32 = arith.constant 0 : i32
    %c0_i32_0 = arith.constant 0 : i32
    return %arg0, %c0_i32 : i32, i32
  }
  func.func @transform_1(%arg0: i32) -> (i32, i32) {
    %c0_i32 = arith.constant 0 : i32
    %c0_i32_0 = arith.constant 0 : i32
    %c0_i32_1 = arith.constant 0 : i32
    return %c0_i32, %c0_i32_0 : i32, i32
  }
  func.func @transform_2(%arg0: i32) -> (i32, i32) {
    %c0_i32 = arith.constant 0 : i32
    %c0_i32_0 = arith.constant 0 : i32
    return %arg0, %c0_i32 : i32, i32
  }
}

</mosaic_0001>

<llo_original>
// kernel: projection_matrix_forward.1
$region0: #{projection_matrix_forward.1}
  #allocation0 [shape = 'u32[]', space=smem, size = 0x4, offset = 0x4, fixed_abs, tag = 'smem constant byte address 0x4 - core index']
  #allocation1 [shape = 'u32[144,128]{1,0:T(1,128)}', space=vmem, size = 0x12000, scoped, tag = 'internal scratch']
  %s0 = inlined_call_operand.hbm [shape: f32[16,32], index: 0, kind: input, shape index: {}]
  %s1 = inlined_call_operand.hbm [shape: f32[32,64], index: 1, kind: input, shape index: {}]
  %s2 = inlined_call_operand.hbm [shape: f32[16,64], index: 2, kind: output, shape index: {}]
  %s3 = sld [smem:[#allocation0]]
  $region49: #{projection_matrix_forward.1} parent=0
    _
  %s5 = ssub.s32 1, %s3
  %s6 = scalar_select 0, %s5, %s3
  $region1: #{projection_matrix_forward.1} parent=0
    #allocation2 [shape = 'u8[8192]{0}', space=vmem, size = 0x2000, scoped, tag = 'input window, operand 0']
    #allocation3 [shape = 's32[2]{0}', space=sflag, size = 0x8, scoped, tag = 'scoped memory for projection_matrix_forward.1']
    #allocation4 [shape = 's32[2]{0}', space=sflag, size = 0x8, scoped, tag = 'scoped memory for projection_matrix_forward.1']
    #allocation5 [shape = 'u8[16384]{0}', space=vmem, size = 0x4000, scoped, tag = 'input window, operand 1, single buffered']
    #allocation6 [shape = 's32[1]{0}', space=sflag, size = 0x4, scoped, tag = 'scoped memory for projection_matrix_forward.1']
    #allocation7 [shape = 'u8[8192]{0}', space=vmem, size = 0x2000, scoped, tag = 'output window, operand 0']
    %7 = vsyncpa [#allocation3], 0
    %s8 = scalar_lea.sflag [#allocation3], 1
    %9 = vsyncpa %s8, 0
    %10 = vsyncpa [#allocation6], 0
    %11 = vsyncpa [#allocation4], 0
    %s12 = scalar_lea.sflag [#allocation4], 1
    %13 = vsyncpa %s12, 0
    loop: start=0, step=1, limit=4
    $region2: #{projection_matrix_forward.1} parent=1 // loop_pre_header
      _
    $region3: #{projection_matrix_forward.1} parent=1 // loop_header
      %s15 = sphi 0, %s19
      %p16 = scmp.ge.s32.totalorder %s15, 4
      %s25 = sphi 0, %s27
      %s28 = sphi 0, %s25
      %s29 = sphi 0, %s28
      %s45 = sphi 0, %s29
      %s49 = sphi 0, %s49
      %s51 = sphi 0, %s49
      %s52 = sphi 0, %s51
      %s66 = sphi 0, %s52
      %s72 = sphi 0, %s74
      %s75 = sphi 0, %s72
      %s76 = sphi 0, %s75
      %s92 = sphi 0, %s76
    $region4: #{projection_matrix_forward.1} parent=1 // loop_header_branch
      %18 = sbr.rel (%p16) target = $region8
    $region5: #{projection_matrix_forward.1} parent=1 // loop_body
      %s20 = ssub.s32 %s15, 1
      %s21 = ssub.s32 %s15, 2
      %s22 = sadd.s32 %s15, 1
      %s23 = ssub.s32 %s15, %s22
      %p24 = scmp.eq.s32.totalorder %s23, 0
      %s26 = sadd.s32 %s25, 1
      %s27 = scalar_select %p24, %s25, %s26
      %p30 = pneg %p24
      %p31 = scmp.eq.s32.totalorder %s15, 1
      %p32 = por %p30, %p31
      %p33 = scmp.ne.s32.totalorder %s25, %s28
      %p34 = scmp.eq.s32.totalorder %s15, 0
      %p35 = por %p33, %p34
      %p36 = scmp.ne.s32.totalorder %s25, %s28
      %p37 = scmp.eq.s32.totalorder %s20, 1
      %p38 = por %p36, %p37
      %p39 = scmp.ne.s32.totalorder %s28, %s29
      %p40 = scmp.eq.s32.totalorder %s20, 0
      %p41 = por %p39, %p40
      %p42 = scmp.ne.s32.totalorder %s28, %s29
      %p43 = scmp.eq.s32.totalorder %s21, 1
      %p44 = por %p42, %p43
      %p46 = scmp.ne.s32.totalorder %s29, %s45
      %p47 = scmp.eq.s32.totalorder %s21, 0
      %p48 = por %p46, %p47
      %s50 = sadd.s32 %s49, 1
      %p53 = scmp.eq.s32.totalorder %s15, 1
      %p54 = scmp.ne.s32.totalorder %s49, %s51
      %p55 = scmp.eq.s32.totalorder %s15, 0
      %p56 = por %p54, %p55
      %p57 = scmp.ne.s32.totalorder %s49, %s51
      %p58 = scmp.eq.s32.totalorder %s20, 1
      %p59 = por %p57, %p58
      %p60 = scmp.ne.s32.totalorder %s51, %s52
      %p61 = scmp.eq.s32.totalorder %s20, 0
      %p62 = por %p60, %p61
      %p63 = scmp.ne.s32.totalorder %s51, %s52
      %p64 = scmp.eq.s32.totalorder %s21, 1
      %p65 = por %p63, %p64
      %p67 = scmp.ne.s32.totalorder %s52, %s66
      %p68 = scmp.eq.s32.totalorder %s21, 0
      %p69 = por %p67, %p68
      %s70 = ssub.s32 %s15, %s22
      %p71 = scmp.eq.s32.totalorder %s70, 0
      %s73 = sadd.s32 %s72, 1
      %s74 = scalar_select %p71, %s72, %s73
      %p77 = pneg %p71
      %p78 = scmp.eq.s32.totalorder %s15, 1
      %p79 = por %p77, %p78
      %p80 = scmp.ne.s32.totalorder %s72, %s75
      %p81 = scmp.eq.s32.totalorder %s15, 0
      %p82 = por %p80, %p81
      %p83 = scmp.ne.s32.totalorder %s72, %s75
      %p84 = scmp.eq.s32.totalorder %s20, 1
      %p85 = por %p83, %p84
      %p86 = scmp.ne.s32.totalorder %s75, %s76
      %p87 = scmp.eq.s32.totalorder %s20, 0
      %p88 = por %p86, %p87
      %p89 = scmp.ne.s32.totalorder %s75, %s76
      %p90 = scmp.eq.s32.totalorder %s21, 1
      %p91 = por %p89, %p90
      %p93 = scmp.ne.s32.totalorder %s76, %s92
      %p94 = scmp.eq.s32.totalorder %s21, 0
      %p95 = por %p93, %p94
      %p96 = scmp.le.s32.totalorder 1, %s15
      %p97 = scmp.lt.s32.totalorder %s15, 3
      %p98 = pnand %p96, %p97
      %p99 = pneg %p98
      // Predicated region
      $region9: #{projection_matrix_forward.1} parent=5 // pred_check
        _
      $region10: #{projection_matrix_forward.1} parent=5 // pred_check_branch
        %101 = sbr.rel (%p98) target = $region12
      $region11: #{projection_matrix_forward.1} parent=5 // pred_region
        %s102 = ssub.s32 %s15, 1
        // Predicated region
        $region13: #{projection_matrix_forward.1} parent=11 // pred_check
          %p103 = pneg %p62
        $region14: #{projection_matrix_forward.1} parent=11 // pred_check_branch
          %105 = sbr.rel (%p103) target = $region16
        $region15: #{projection_matrix_forward.1} parent=11 // pred_region
          %s107 = ssub.s32 512, 512
          %108 = vsyncadd [#allocation6], %s107
          %s109 = sshll.u32 [#allocation5], 4
          %s110 = int_to_ptr.vmem [resolvable:$true] %s109
          %115 = dma.hbm_to_vmem [thread:$0]  %s1, 512, %s110, [#allocation6], 128, 128, 8
        $region16: #{projection_matrix_forward.1} parent=11 // pred_fallthru
          _
      $region12: #{projection_matrix_forward.1} parent=5 // pred_fallthru
        _
      %p116 = scmp.lt.s32.totalorder %s15, 2
      // Predicated region
      $region17: #{projection_matrix_forward.1} parent=5 // pred_check
        %p117 = pneg %p116
      $region18: #{projection_matrix_forward.1} parent=5 // pred_check_branch
        %119 = sbr.rel (%p117) target = $region20
      $region19: #{projection_matrix_forward.1} parent=5 // pred_region
        // Predicated region
        $region21: #{projection_matrix_forward.1} parent=19 // pred_check
          %p120 = pneg %p35
        $region22: #{projection_matrix_forward.1} parent=19 // pred_check_branch
          %122 = sbr.rel (%p120) target = $region24
        $region23: #{projection_matrix_forward.1} parent=19 // pred_region
          %s123 = sand.u32 %s25, 1
          %s124 = scalar_lea.sflag [#allocation3], %s123
          %s125 = sand.u32 %s25, 1
          %s126 = smul.addr %s125, 8
          %s127 = scalar_lea.vmem [#allocation2], %s126
          %s129 = ssub.s32 128, 128
          %130 = vsyncadd %s124, %s129
          %s131 = smul.addr %s15, 128
          %s132 = scalar_lea.hbm %s0, %s131
          %s134 = sshll.u32 %s127, 4
          %s135 = int_to_ptr.vmem [resolvable:$true] %s134
          %137 = dma.hbm_to_vmem [thread:$0]  %s132, 128, %s135, %s124
        $region24: #{projection_matrix_forward.1} parent=19 // pred_fallthru
          _
      $region20: #{projection_matrix_forward.1} parent=5 // pred_fallthru
        _
      %p138 = scmp.le.s32.totalorder 1, %s15
      %p139 = scmp.lt.s32.totalorder %s15, 3
      %p140 = pnand %p138, %p139
      %p141 = pneg %p140
      // Predicated region
      $region25: #{projection_matrix_forward.1} parent=5 // pred_check
        _
      $region26: #{projection_matrix_forward.1} parent=5 // pred_check_branch
        %143 = sbr.rel (%p140) target = $region28
      $region27: #{projection_matrix_forward.1} parent=5 // pred_region
        %s144 = ssub.s32 %s15, 1
        %s145 = sand.u32 %s28, 1
        %s146 = scalar_lea.sflag [#allocation3], %s145
        %s147 = sand.u32 %s28, 1
        %s148 = smul.addr %s147, 8
        %s149 = scalar_lea.vmem [#allocation2], %s148
        // Predicated region
        $region29: #{projection_matrix_forward.1} parent=27 // pred_check
          %p150 = pneg %p41
        $region30: #{projection_matrix_forward.1} parent=27 // pred_check_branch
          %152 = sbr.rel (%p150) target = $region32
        $region31: #{projection_matrix_forward.1} parent=27 // pred_region
          %153 = dma.done %s146, 128
        $region32: #{projection_matrix_forward.1} parent=27 // pred_fallthru
          _
        // Predicated region
        $region33: #{projection_matrix_forward.1} parent=27 // pred_check
          %p154 = pneg %p62
        $region34: #{projection_matrix_forward.1} parent=27 // pred_check_branch
          %156 = sbr.rel (%p154) target = $region36
        $region35: #{projection_matrix_forward.1} parent=27 // pred_region
          %157 = dma.done [#allocation6], 512
        $region36: #{projection_matrix_forward.1} parent=27 // pred_fallthru
          _
        %s158 = sand.u32 %s28, 1
        %s159 = scalar_lea.sflag [#allocation3], %s158
        %s160 = sand.u32 %s28, 1
        %s161 = smul.addr %s160, 8
        %s162 = scalar_lea.vmem [#allocation2], %s161
        %p163 = pneg %p41
        %p164 = pneg %p38
        %p165 = pneg %p62
        %p166 = pneg %p59
        %p167 = pneg %p88
        %p168 = pneg %p85
        %s169 = sand.u32 %s75, 1
        %s170 = scalar_lea.sflag [#allocation4], %s169
        %s171 = sand.u32 %s75, 1
        %s172 = smul.addr %s171, 8
        %s173 = scalar_lea.vmem [#allocation7], %s172
        %v174 = vld [vmem:[%s149] sm:$0xff]
        %v175 = vld [vmem:[#allocation5] sm:$0xff]
        %v176 = vld [vmem:[#allocation5 + $0x8] sm:$0xff]
        %v177 = vld [vmem:[#allocation5 + $0x10] sm:$0xff]
        %v178 = vld [vmem:[#allocation5 + $0x18] sm:$0xff]
        %vm179 = vcmask 261120
        %v181 = vsel %vm179, %v174, 0
        %183 = vmatprep.subr.mxu0 0.0
        %184 = vmatpush1.msra.mxu0 %v175
        %185 = vmatprep.subr.mxu0 0.0
        %186 = vmatpush1.msra.mxu0 %v176
        %187 = vmatprep.subr.mxu0 0.0
        %188 = vmatpush1.msra.mxu0 %v177
        %189 = vmatprep.subr.mxu0 0.0
        %190 = vmatpush1.msra.mxu0 %v178
        %191 = vmatprep.subr.mxu0 0.0
        %192 = vmatpush1.msra.mxu0 0.0
        %193 = vmatprep.subr.mxu0 0.0
        %194 = vmatpush1.msra.mxu0 0.0
        %195 = vmatprep.subr.mxu0 0.0
        %196 = vmatpush1.msra.mxu0 0.0
        %197 = vmatprep.subr.mxu0 0.0
        %198 = vmatpush1.msra.mxu0 0.0
        %199 = vmatprep.subr.mxu0 0.0
        %200 = vmatpush1.msra.mxu0 0.0
        %201 = vmatprep.subr.mxu0 0.0
        %202 = vmatpush1.msra.mxu0 0.0
        %203 = vmatprep.subr.mxu0 0.0
        %204 = vmatpush1.msra.mxu0 0.0
        %205 = vmatprep.subr.mxu0 0.0
        %206 = vmatpush1.msra.mxu0 0.0
        %207 = vmatprep.subr.mxu0 0.0
        %208 = vmatpush1.msra.mxu0 0.0
        %209 = vmatprep.subr.mxu0 0.0
        %210 = vmatpush1.msra.mxu0 0.0
        %211 = vmatprep.subr.mxu0 0.0
        %212 = vmatpush1.msra.mxu0 0.0
        %213 = vmatprep.subr.mxu0 0.0
        %214 = vmatpush1.msra.mxu0 0.0
        %215 = vmatprep.subr.mxu0 0.0
        %216 = vmatpush1.msra.mxu0 0.0
        %217 = vmatprep.subr.mxu0 0.0
        %218 = vmatpush1.msra.mxu0 0.0
        %219 = vmatprep.subr.mxu0 0.0
        %220 = vmatpush1.msra.mxu0 0.0
        %221 = vmatprep.subr.mxu0 0.0
        %222 = vmatpush1.msra.mxu0 0.0
        %223 = vmatprep.subr.mxu0 0.0
        %224 = vmatpush1.msra.mxu0 0.0
        %225 = vmatprep.subr.mxu0 0.0
        %226 = vmatpush1.msra.mxu0 0.0
        %227 = vmatprep.subr.mxu0 0.0
        %228 = vmatpush1.msra.mxu0 0.0
        %229 = vmatprep.subr.mxu0 0.0
        %230 = vmatpush1.msra.mxu0 0.0
        %231 = vmatprep.subr.mxu0 0.0
        %232 = vmatpush1.msra.mxu0 0.0
        %233 = vmatprep.subr.mxu0 0.0
        %234 = vmatpush1.msra.mxu0 0.0
        %235 = vmatprep.subr.mxu0 0.0
        %236 = vmatpush1.msra.mxu0 0.0
        %237 = vmatprep.subr.mxu0 0.0
        %238 = vmatpush1.msra.mxu0 0.0
        %239 = vmatprep.subr.mxu0 0.0
        %240 = vmatpush1.msra.mxu0 0.0
        %241 = vmatprep.subr.mxu0 0.0
        %242 = vmatpush1.msra.mxu0 0.0
        %243 = vmatprep.subr.mxu0 0.0
        %244 = vmatpush1.msra.mxu0 0.0
        %245 = vmatprep.subr.mxu0 0.0
        %246 = vmatpush1.msra.mxu0 0.0
        %247 = vmatprep.mubr.f32.mxu0 0.0
        %248 = vmatmul.mubr.f32.gmra.mrb[0].mxu0 %v181
        %v249 = vpop.f32.mrb[0].mxu0
        %v250 = vadd.f32 0.0, %v249
        %v251 = vpop.f32.mrb[0].mxu0
        %252 = vdwg.mxu0
        %vm253 = vcmask 523264
        %254 = vst.msk [vmem:[%s173] sm:$0xff] %vm253, %v250
        %s255 = sand.u32 %s75, 1
        %s256 = scalar_lea.sflag [#allocation4], %s255
        %s257 = sand.u32 %s75, 1
        %s258 = smul.addr %s257, 8
        %s259 = scalar_lea.vmem [#allocation7], %s258
        // Predicated region
        $region37: #{projection_matrix_forward.1} parent=27 // pred_check
          %p260 = pneg %p85
        $region38: #{projection_matrix_forward.1} parent=27 // pred_check_branch
          %262 = sbr.rel (%p260) target = $region40
        $region39: #{projection_matrix_forward.1} parent=27 // pred_region
          %s264 = ssub.s32 128, 128
          %265 = vsyncadd %s256, %s264
          %s266 = smul.addr %s20, 128
          %s267 = scalar_lea.hbm %s2, %s266
          %s269 = sshll.u32 %s259, 4
          %s270 = int_to_ptr.vmem [resolvable:$true] %s269
          %272 = dma.vmem_to_hbm [thread:$0]  %s270, 128, %s267, %s256
        $region40: #{projection_matrix_forward.1} parent=27 // pred_fallthru
          _
      $region28: #{projection_matrix_forward.1} parent=5 // pred_fallthru
        _
      %p273 = scmp.le.s32.totalorder 2, %s15
      // Predicated region
      $region41: #{projection_matrix_forward.1} parent=5 // pred_check
        %p274 = pneg %p273
      $region42: #{projection_matrix_forward.1} parent=5 // pred_check_branch
        %276 = sbr.rel (%p274) target = $region44
      $region43: #{projection_matrix_forward.1} parent=5 // pred_region
        %s277 = ssub.s32 %s15, 2
        // Predicated region
        $region45: #{projection_matrix_forward.1} parent=43 // pred_check
          %p278 = pneg %p91
        $region46: #{projection_matrix_forward.1} parent=43 // pred_check_branch
          %280 = sbr.rel (%p278) target = $region48
        $region47: #{projection_matrix_forward.1} parent=43 // pred_region
          %s281 = sand.u32 %s76, 1
          %s282 = scalar_lea.sflag [#allocation4], %s281
          %s283 = sand.u32 %s76, 1
          %s284 = smul.addr %s283, 8
          %s285 = scalar_lea.vmem [#allocation7], %s284
          %286 = dma.done %s282, 128
        $region48: #{projection_matrix_forward.1} parent=43 // pred_fallthru
          _
      $region44: #{projection_matrix_forward.1} parent=5 // pred_fallthru
        _
    $region6: #{projection_matrix_forward.1} parent=1 // loop_footer
      %s19 = sadd.s32 1, %s15
    $region7: #{projection_matrix_forward.1} parent=1 // loop_footer_branch
      %14 = sbr.rel target = $region3
    $region8: #{projection_matrix_forward.1} parent=1 // loop_exit
      _
    %287 = vsyncpa [#allocation3], 1
    %s288 = scalar_lea.sflag [#allocation3], 1
    %289 = vsyncpa %s288, 1
    %290 = vsyncpa [#allocation6], 1
    %291 = vsyncpa [#allocation4], 1
    %s292 = scalar_lea.sflag [#allocation4], 1
    %293 = vsyncpa %s292, 1

</llo_original>
